<compile_context>
chip_gen: v7x
topology: tpu7x:2x2x1
jax: 0.10.0
libtpu: 0.0.40
codegen_flags: <defaults>
</compile_context>

<pallas_src>
import math

import jax
import jax.numpy as jnp
from jax.experimental import pallas as pl
from jax.experimental.pallas import tpu as pltpu


def _round_up(v, m):
    return (v + m - 1) // m * m


# ----------------------------------------------------------------------------
# ROI align (plain JAX glue) — reproduces torchvision.ops.roi_align defaults.
# Returns features already flattened to (N, C*P*P).
# ----------------------------------------------------------------------------
def _roi_align_nchw_flat(feat, rois, output_size, spatial_scale=1.0):
    """feat: (B,C,H,W) f32; rois: (N,5) [batch_idx, x1, y1, x2, y2] f32."""
    B, C, H, W = feat.shape
    P = int(output_size)
    N = rois.shape[0]

    batch_idx = rois[:, 0].astype(jnp.int32)
    x1 = rois[:, 1] * spatial_scale
    y1 = rois[:, 2] * spatial_scale
    x2 = rois[:, 3] * spatial_scale
    y2 = rois[:, 4] * spatial_scale

    roi_w = jnp.maximum(x2 - x1, 1.0)           # aligned=False semantics
    roi_h = jnp.maximum(y2 - y1, 1.0)
    bin_h = roi_h / P
    bin_w = roi_w / P
    grid_h = jnp.ceil(roi_h / P).astype(jnp.int32)   # sampling_ratio=-1 (adaptive)
    grid_w = jnp.ceil(roi_w / P).astype(jnp.int32)
    count = jnp.maximum(grid_h * grid_w, 1).astype(jnp.float32)

    # TODO(synk): static sampling-grid upper bound assumes ROIs lie within the
    # feature map extent (true for the synthetic proposals built below); boxes
    # larger than the feature map would diverge from torchvision.roi_align.
    Gh = max(int(math.ceil(H / P)), 1)
    Gw = max(int(math.ceil(W / P)), 1)

    ph = jnp.arange(P, dtype=jnp.float32).reshape(1, P, 1, 1, 1)
    pw = jnp.arange(P, dtype=jnp.float32).reshape(1, 1, P, 1, 1)
    iy = jnp.arange(Gh, dtype=jnp.float32).reshape(1, 1, 1, Gh, 1)
    ix = jnp.arange(Gw, dtype=jnp.float32).reshape(1, 1, 1, 1, Gw)

    y1b = y1.reshape(N, 1, 1, 1, 1)
    x1b = x1.reshape(N, 1, 1, 1, 1)
    bhb = bin_h.reshape(N, 1, 1, 1, 1)
    bwb = bin_w.reshape(N, 1, 1, 1, 1)
    ghf = grid_h.astype(jnp.float32).reshape(N, 1, 1, 1, 1)
    gwf = grid_w.astype(jnp.float32).reshape(N, 1, 1, 1, 1)

    shape5 = (N, P, P, Gh, Gw)
    y = jnp.broadcast_to(y1b + ph * bhb + (iy + 0.5) * bhb / ghf, shape5)
    x = jnp.broadcast_to(x1b + pw * bwb + (ix + 0.5) * bwb / gwf, shape5)

    sample_mask = jnp.broadcast_to(
        (jnp.arange(Gh).reshape(1, 1, 1, Gh, 1) < grid_h.reshape(N, 1, 1, 1, 1))
        & (jnp.arange(Gw).reshape(1, 1, 1, 1, Gw) < grid_w.reshape(N, 1, 1, 1, 1)),
        shape5,
    )

    invalid = (y < -1.0) | (y > H) | (x < -1.0) | (x > W)
    yc = jnp.maximum(y, 0.0)
    xc = jnp.maximum(x, 0.0)
    y_low = jnp.floor(yc).astype(jnp.int32)
    x_low = jnp.floor(xc).astype(jnp.int32)
    y_hi_case = y_low >= H - 1
    x_hi_case = x_low >= W - 1
    y_low = jnp.where(y_hi_case, H - 1, y_low)
    x_low = jnp.where(x_hi_case, W - 1, x_low)
    y_high = jnp.where(y_hi_case, H - 1, y_low + 1)
    x_high = jnp.where(x_hi_case, W - 1, x_low + 1)
    yc = jnp.where(y_hi_case, y_low.astype(jnp.float32), yc)
    xc = jnp.where(x_hi_case, x_low.astype(jnp.float32), xc)

    ly = yc - y_low.astype(jnp.float32)
    lx = xc - x_low.astype(jnp.float32)
    hy = 1.0 - ly
    hx = 1.0 - lx
    w1 = hy * hx
    w2 = hy * lx
    w3 = ly * hx
    w4 = ly * lx

    feat_flat = feat.reshape(B, C, H * W)
    feat_roi = feat_flat[batch_idx]                      # (N, C, H*W)

    def gather(yi, xi):
        idx = (yi * W + xi).reshape(N, 1, -1)
        v = jnp.take_along_axis(feat_roi, idx, axis=2)
        return v.reshape(N, C, P, P, Gh, Gw)

    v1 = gather(y_low, x_low)
    v2 = gather(y_low, x_high)
    v3 = gather(y_high, x_low)
    v4 = gather(y_high, x_high)

    val = (w1[:, None] * v1 + w2[:, None] * v2
           + w3[:, None] * v3 + w4[:, None] * v4)
    val = jnp.where((~invalid & sample_mask)[:, None], val, 0.0)
    out = val.sum(axis=(-2, -1)) / count.reshape(N, 1, 1, 1)   # (N, C, P, P)
    return out.reshape(N, C * P * P)                           # channel-major flatten


# ----------------------------------------------------------------------------
# Pallas kernel: single fused (fc_cls ++ fc_bbox) head, K-tiled accumulation.
#   out[i,:] = x[i,:] @ W_comb + b_comb
# Grid: (N_tiles [parallel], K_tiles [arbitrary]).  Output block stays resident
# across the K axis; bias added only on the last K step.
# ----------------------------------------------------------------------------
def _fused_heads_kernel(x_ref, w_ref, b_ref, out_ref, acc_ref):
    k = pl.program_id(1)

    @pl.when(k == 0)
    def _init():
        acc_ref[...] = jnp.zeros_like(acc_ref)

    acc_ref[...] += jnp.dot(
        x_ref[...], w_ref[...], preferred_element_type=jnp.float32
    )

    @pl.when(k == pl.num_programs(1) - 1)
    def _finalize():
        out_ref[...] = acc_ref[...] + b_ref[...]


def fused_heads_pallas(x, w_comb, b_comb, num_cls, num_bbox,
                       *, tile_n=128, tile_k=512):
    """x: (N, F) f32.  w_comb: (F_pad, O_pad) bf16 (pre-transposed, zero-padded).
    b_comb: (1, O_pad) f32.  Returns (cls (N,num_cls) f32, bbox (N,num_bbox) f32)."""
    N, F = x.shape
    F_pad, O_pad = w_comb.shape
    assert b_comb.shape == (1, O_pad)
    assert F <= F_pad and num_cls + num_bbox <= O_pad

    # Row tile: 128 for real workloads, shrunk (multiple of 16 for bf16 sublane
    # packing) for tiny demo N so we don't matmul 9x padding.
    tn = min(tile_n, _round_up(max(N, 1), 16))
    tk = min(tile_k, F_pad)
    assert F_pad % tk == 0, "weights must be pre-padded to a multiple of tile_k"

    n_pad = _round_up(max(N, 1), tn)
    x_p = jnp.pad(x.astype(jnp.bfloat16), ((0, n_pad - N), (0, F_pad - F)))

    grid = (n_pad // tn, F_pad // tk)

    out = pl.pallas_call(
        _fused_heads_kernel,
        out_shape=jax.ShapeDtypeStruct((n_pad, O_pad), jnp.float32),
        grid=grid,
        in_specs=[
            pl.BlockSpec((tn, tk), lambda i, k: (i, k)),        # x tile
            pl.BlockSpec((tk, O_pad), lambda i, k: (k, 0)),     # fused weights
            pl.BlockSpec((1, O_pad), lambda i, k: (0, 0)),      # fused bias
        ],
        out_specs=pl.BlockSpec((tn, O_pad), lambda i, k: (i, 0)),
        scratch_shapes=[pltpu.VMEM((tn, O_pad), jnp.float32)],
        compiler_params=pltpu.CompilerParams(
            dimension_semantics=("parallel", "arbitrary")),
    )(x_p, w_comb, b_comb)

    cls_logits = out[:N, :num_cls]
    bbox_preds = out[:N, num_cls:num_cls + num_bbox]
    return cls_logits, bbox_preds


# ----------------------------------------------------------------------------
# ROIHeads module equivalent.
# ----------------------------------------------------------------------------
class ROIHeadsPallas:
    def __init__(self, params, key):
        self.in_channels = params["in_channels"]
        self.num_classes = params["num_classes"]
        self.roi_pool_output_size = params["pool_output_size"]
        self.bs = params["batch_size"]

        feat_dim = self.in_channels * self.roi_pool_output_size ** 2
        NC = self.num_classes
        NB = self.num_classes * 4
        self.feat_dim = feat_dim
        self.nc = NC
        self.nb = NB

        k1, k2, k3, k4 = jax.random.split(key, 4)
        # Deterministic synthetic init; stored (out, in) like nn.Linear.weight.
        self.w_cls = 0.05 * jax.random.normal(k1, (NC, feat_dim), jnp.float32)
        self.b_cls = 0.05 * jax.random.normal(k2, (NC,), jnp.float32)
        self.w_bbox = 0.05 * jax.random.normal(k3, (NB, feat_dim), jnp.float32)
        self.b_bbox = 0.05 * jax.random.normal(k4, (NB,), jnp.float32)

        # Pre-build fused, transposed, zero-padded kernel weights ONCE:
        #   W_comb: (F_pad, O_pad) bf16, columns [cls | bbox | zero pad]
        #   b_comb: (1, O_pad) f32
        tk = min(512, _round_up(feat_dim, 128))
        f_pad = _round_up(feat_dim, tk)
        o_pad = _round_up(NC + NB, 128)
        w_comb = jnp.zeros((f_pad, o_pad), jnp.float32)
        w_comb = w_comb.at[:feat_dim, :NC].set(self.w_cls.T)
        w_comb = w_comb.at[:feat_dim, NC:NC + NB].set(self.w_bbox.T)
        self.w_comb = w_comb.astype(jnp.bfloat16)
        b_comb = jnp.zeros((1, o_pad), jnp.float32)
        b_comb = b_comb.at[0, :NC].set(self.b_cls)
        b_comb = b_comb.at[0, NC:NC + NB].set(self.b_bbox)
        self.b_comb = b_comb

    def __call__(self, feature_maps, proposals_list):
        # Batch all images' ROIs into one roi_align + one pallas_call.
        rois = []
        counts = []
        for i in range(self.bs):
            proposals = proposals_list[i]
            batch_indices = jnp.full((proposals.shape[0], 1), i, dtype=proposals.dtype)
            rois.append(jnp.concatenate((batch_indices, proposals), axis=1))
            counts.append(proposals.shape[0])
        rois_all = jnp.concatenate(rois, axis=0)          # (N_total, 5)

        x = _roi_align_nchw_flat(
            feature_maps, rois_all, self.roi_pool_output_size)   # (N_total, F)

        cls_all, bbox_all = fused_heads_pallas(
            x, self.w_comb, self.b_comb, self.nc, self.nb)

        # Split back per image (preserves the original per-image list output).
        all_cls_logits, all_bbox_preds = [], []
        off = 0
        for n in counts:
            all_cls_logits.append(cls_all[off:off + n])
            all_bbox_preds.append(bbox_all[off:off + n])
            off += n
        return all_cls_logits, all_bbox_preds


if __name__ == "__main__":
    params = {
        "in_channels": 4,
        "num_classes": 5,
        "pool_output_size": 4,
        "batch_size": 2,
    }
    B, C, H, W = params["batch_size"], params["in_channels"], 16, 16

    key = jax.random.PRNGKey(0)
    kf, kp, kw = jax.random.split(key, 3)

    feature_maps = jax.random.normal(kf, (B, C, H, W), jnp.float32)

    # Variable number of proposals per image, boxes in feature-map coords.
    n_rois = [6, 8]
    proposals_list = []
    for i in range(B):
        kp, k1, k2 = jax.random.split(kp, 3)
        xy = jax.random.uniform(k1, (n_rois[i], 2), minval=0.0, maxval=9.0)
        wh = jax.random.uniform(k2, (n_rois[i], 2), minval=1.0, maxval=5.0)
        proposals_list.append(
            jnp.concatenate([xy, xy + wh], axis=1).astype(jnp.float32)
        )

    model = ROIHeadsPallas(params, kw)
    all_cls_logits, all_bbox_preds = model(feature_maps, proposals_list)

    # Plain-JAX reference check of the FC heads (loose tol: bf16 matmul inputs).
    for i in range(B):
        rois_i = jnp.concatenate(
            [jnp.full((n_rois[i], 1), i, jnp.float32), proposals_list[i]], axis=1)
        x_ref = _roi_align_nchw_flat(feature_maps, rois_i, params["pool_output_size"])
        cls_ref = x_ref @ model.w_cls.T + model.b_cls
        bbox_ref = x_ref @ model.w_bbox.T + model.b_bbox
        c = jax.block_until_ready(all_cls_logits[i])
        b = jax.block_until_ready(all_bbox_preds[i])
        assert c.shape == (n_rois[i], params["num_classes"])
        assert b.shape == (n_rois[i], params["num_classes"] * 4)
        assert jnp.allclose(c, cls_ref, rtol=5e-2, atol=5e-2)
        assert jnp.allclose(b, bbox_ref, rtol=5e-2, atol=5e-2)

    print("KERNEL_OK")
</pallas_src>

<mosaic_0001>
module attributes {stable_mosaic.version = 11 : i64} {
  func.func @_fused_heads_kernel(%arg0: i32, %arg1: i32, %arg2: memref<16x128xbf16, #tpu.memory_space<vmem>>, %arg3: memref<128x128xbf16, #tpu.memory_space<vmem>>, %arg4: memref<1x128xf32, #tpu.memory_space<vmem>>, %arg5: memref<16x128xf32, #tpu.memory_space<vmem>>, %arg6: memref<16x128xf32, #tpu.memory_space<vmem>>) attributes {dimension_semantics = [#tpu.dimension_semantics<parallel>, #tpu.dimension_semantics<arbitrary>], iteration_bounds = array<i64: 1, 1>, scalar_prefetch = 0 : i64, scratch_operands = 1 : i64, tpu.core_type = #tpu.core_type<tc>, window_params = [{transform_indices = @transform_0, window_bounds = array<i64: 16, 128>}, {transform_indices = @transform_1, window_bounds = array<i64: 128, 128>}, {pipeline_mode = #tpu.pipeline_mode<synchronous>, transform_indices = @transform_2, window_bounds = array<i64: 1, 128>}, {transform_indices = @transform_3, window_bounds = array<i64: 16, 128>}]} {
    %c0_i32 = arith.constant 0 : i32
    %0 = arith.cmpi eq, %arg1, %c0_i32 : i32
    %1 = arith.extui %0 : i1 to i32
    %c0_i32_0 = arith.constant 0 : i32
    %2 = arith.cmpi ne, %1, %c0_i32_0 : i32
    scf.if %2 {
      %cst_10 = arith.constant 0.000000e+00 : f32
      %12 = vector.broadcast %cst_10 : f32 to vector<16x128xf32>
      %c0_11 = arith.constant 0 : index
      %c0_12 = arith.constant 0 : index
      %13 = vector.load %arg6[%c0_11, %c0_12] : memref<16x128xf32, #tpu.memory_space<vmem>>, vector<16x128xf32>
      tpu.vector_store %arg6[%c0_11, %c0_12], %12 {strides = array<i32>} : memref<16x128xf32, #tpu.memory_space<vmem>>, vector<16x128xf32>,
    } else {
    }
    %c0 = arith.constant 0 : index
    %c0_1 = arith.constant 0 : index
    %3 = vector.load %arg6[%c0, %c0_1] : memref<16x128xf32, #tpu.memory_space<vmem>>, vector<16x128xf32>
    %c0_2 = arith.constant 0 : index
    %c0_3 = arith.constant 0 : index
    %4 = vector.load %arg2[%c0_2, %c0_3] : memref<16x128xbf16, #tpu.memory_space<vmem>>, vector<16x128xbf16>
    %c0_4 = arith.constant 0 : index
    %c0_5 = arith.constant 0 : index
    %5 = vector.load %arg3[%c0_4, %c0_5] : memref<128x128xbf16, #tpu.memory_space<vmem>>, vector<128x128xbf16>
    %cst = arith.constant dense<0.000000e+00> : vector<16x128xf32>
    %6 = tpu.matmul %4, %5, %cst {dimension_numbers = #tpu.dot_dimension_numbers<[1], [0], [0], [1], [0, 0, 1, 1], [], []>} : vector<16x128xbf16>, vector<128x128xbf16>, vector<16x128xf32> -> vector<16x128xf32>
    %7 = arith.addf %3, %6 : vector<16x128xf32>
    %c0_6 = arith.constant 0 : index
    %c0_7 = arith.constant 0 : index
    %8 = vector.load %arg6[%c0_6, %c0_7] : memref<16x128xf32, #tpu.memory_space<vmem>>, vector<16x128xf32>
    tpu.vector_store %arg6[%c0_6, %c0_7], %7 {strides = array<i32>} : memref<16x128xf32, #tpu.memory_space<vmem>>, vector<16x128xf32>,
    %c0_i32_8 = arith.constant 0 : i32
    %9 = arith.cmpi eq, %arg1, %c0_i32_8 : i32
    %10 = arith.extui %9 : i1 to i32
    %c0_i32_9 = arith.constant 0 : i32
    %11 = arith.cmpi ne, %10, %c0_i32_9 : i32
    scf.if %11 {
      %c0_10 = arith.constant 0 : index
      %c0_11 = arith.constant 0 : index
      %12 = vector.load %arg6[%c0_10, %c0_11] : memref<16x128xf32, #tpu.memory_space<vmem>>, vector<16x128xf32>
      %c0_12 = arith.constant 0 : index
      %c0_13 = arith.constant 0 : index
      %13 = vector.load %arg4[%c0_12, %c0_13] : memref<1x128xf32, #tpu.memory_space<vmem>>, vector<1x128xf32>
      %14 = vector.broadcast %13 : vector<1x128xf32> to vector<16x128xf32>
      %15 = arith.addf %12, %14 : vector<16x128xf32>
      %c0_14 = arith.constant 0 : index
      %c0_15 = arith.constant 0 : index
      %16 = vector.load %arg5[%c0_14, %c0_15] : memref<16x128xf32, #tpu.memory_space<vmem>>, vector<16x128xf32>
      tpu.vector_store %arg5[%c0_14, %c0_15], %15 {strides = array<i32>} : memref<16x128xf32, #tpu.memory_space<vmem>>, vector<16x128xf32>,
    } else {
    }
    return
  }
  func.func @transform_0(%arg0: i32, %arg1: i32) -> (i32, i32) {
    %c0_i32 = arith.constant 0 : i32
    return %arg0, %arg1 : i32, i32
  }
  func.func @transform_1(%arg0: i32, %arg1: i32) -> (i32, i32) {
    %c0_i32 = arith.constant 0 : i32
    %c0_i32_0 = arith.constant 0 : i32
    return %arg1, %c0_i32 : i32, i32
  }
  func.func @transform_2(%arg0: i32, %arg1: i32) -> (i32, i32) {
    %c0_i32 = arith.constant 0 : i32
    %c0_i32_0 = arith.constant 0 : i32
    %c0_i32_1 = arith.constant 0 : i32
    return %c0_i32, %c0_i32_0 : i32, i32
  }
  func.func @transform_3(%arg0: i32, %arg1: i32) -> (i32, i32) {
    %c0_i32 = arith.constant 0 : i32
    %c0_i32_0 = arith.constant 0 : i32
    return %arg0, %c0_i32 : i32, i32
  }
}

</mosaic_0001>

<llo_original>
// kernel: tpu_custom_call.1
$region0: #{tpu_custom_call.1}
  #allocation0 [shape = 'u32[]', space=smem, size = 0x4, offset = 0x4, fixed_abs, tag = 'smem constant byte address 0x4 - core index']
  #allocation1 [shape = 'u32[144,128]{1,0:T(1,128)}', space=vmem, size = 0x12000, scoped, tag = 'internal scratch']
  #allocation2 [shape = 'f32[16,128]{1,0:T(8,128)}', space=vmem, size = 0x2000, scoped, tag = 'scratch operand']
  %s0 = inlined_call_operand.hbm [shape: bf16[16,128], index: 0, kind: input, shape index: {}]
  %s1 = inlined_call_operand.hbm [shape: bf16[128,128], index: 1, kind: input, shape index: {}]
  %s2 = inlined_call_operand.vmem [shape: f32[1,128], index: 2, kind: input, shape index: {}]
  %s3 = inlined_call_operand.hbm [shape: f32[16,128], index: 3, kind: output, shape index: {}]
  %s4 = sld [smem:[#allocation0]]
  $region38: #{tpu_custom_call.1} parent=0
    _
  %s6 = ssub.s32 1, %s4
  %s7 = scalar_select 0, %s6, %s4
  $region1: #{tpu_custom_call.1} parent=0
    #allocation3 [shape = 'u8[4096]{0}', space=vmem, size = 0x1000, scoped, tag = 'input window, operand 0, single buffered']
    #allocation4 [shape = 's32[1]{0}', space=sflag, size = 0x4, scoped, tag = 'scoped memory for tpu_custom_call.1']
    #allocation5 [shape = 's32[1]{0}', space=sflag, size = 0x4, scoped, tag = 'scoped memory for tpu_custom_call.1']
    #allocation6 [shape = 'u8[32768]{0}', space=vmem, size = 0x8000, scoped, tag = 'input window, operand 1, single buffered']
    #allocation7 [shape = 's32[1]{0}', space=sflag, size = 0x4, scoped, tag = 'scoped memory for tpu_custom_call.1']
    #allocation8 [shape = 'u8[8192]{0}', space=vmem, size = 0x2000, scoped, tag = 'output window, operand 0, single buffered']
    %8 = vsyncpa [#allocation4], 0
    %9 = vsyncpa [#allocation7], 0
    %10 = vsyncpa [#allocation5], 0
    // Predicated region
    $region2: #{tpu_custom_call.1} parent=1 // pred_check
      _
    $region3: #{tpu_custom_call.1} parent=1 // pred_check_branch
      %12 = sbr.rel (0) target = $region5
    $region4: #{tpu_custom_call.1} parent=1 // pred_region
      %s14 = ssub.s32 128, 128
      %15 = vsyncadd [#allocation4], %s14
      %s16 = sshll.u32 [#allocation3], 4
      %s17 = int_to_ptr.vmem [resolvable:$true] %s16
      %22 = dma.hbm_to_vmem [thread:$0]  %s0, 128, %s17, [#allocation4], 64, 64, 4
    $region5: #{tpu_custom_call.1} parent=1 // pred_fallthru
      _
    // Predicated region
    $region6: #{tpu_custom_call.1} parent=1 // pred_check
      _
    $region7: #{tpu_custom_call.1} parent=1 // pred_check_branch
      %24 = sbr.rel (0) target = $region9
    $region8: #{tpu_custom_call.1} parent=1 // pred_region
      %s26 = ssub.s32 1024, 1024
      %27 = vsyncadd [#allocation7], %s26
      %s28 = sshll.u32 [#allocation6], 4
      %s29 = int_to_ptr.vmem [resolvable:$true] %s28
      %34 = dma.hbm_to_vmem [thread:$0]  %s1, 1024, %s29, [#allocation7], 64, 64, 4
    $region9: #{tpu_custom_call.1} parent=1 // pred_fallthru
      _
    // Predicated region
    $region10: #{tpu_custom_call.1} parent=1 // pred_check
      _
    $region11: #{tpu_custom_call.1} parent=1 // pred_check_branch
      %36 = sbr.rel (0) target = $region13
    $region12: #{tpu_custom_call.1} parent=1 // pred_region
      _
    $region13: #{tpu_custom_call.1} parent=1 // pred_fallthru
      _
    // Predicated region
    $region14: #{tpu_custom_call.1} parent=1 // pred_check
      _
    $region15: #{tpu_custom_call.1} parent=1 // pred_check_branch
      %38 = sbr.rel (0) target = $region17
    $region16: #{tpu_custom_call.1} parent=1 // pred_region
      %39 = dma.done [#allocation4], 128
    $region17: #{tpu_custom_call.1} parent=1 // pred_fallthru
      _
    // Predicated region
    $region18: #{tpu_custom_call.1} parent=1 // pred_check
      _
    $region19: #{tpu_custom_call.1} parent=1 // pred_check_branch
      %41 = sbr.rel (0) target = $region21
    $region20: #{tpu_custom_call.1} parent=1 // pred_region
      %42 = dma.done [#allocation7], 1024
    $region21: #{tpu_custom_call.1} parent=1 // pred_fallthru
      _
    %p44 = scmp.eq.s32.totalorder 0, 0
    // Predicated region
    $region22: #{tpu_custom_call.1} parent=1 // pred_check
      %p45 = pneg %p44
    $region23: #{tpu_custom_call.1} parent=1 // pred_check_branch
      %47 = sbr.rel (%p45) target = $region25
    $region24: #{tpu_custom_call.1} parent=1 // pred_region
      %48 = vst [vmem:[#allocation2] sm:$0xff] 0.0
      %49 = vst [vmem:[#allocation2 + $0x8] sm:$0xff] 0.0
    $region25: #{tpu_custom_call.1} parent=1 // pred_fallthru
      _
    %v50 = vld [vmem:[#allocation2] sm:$0xff]
    %v51 = vld [vmem:[#allocation2 + $0x8] sm:$0xff]
    %v52 = vld [vmem:[#allocation3] sm:$0xf]
    %v53 = vld [vmem:[#allocation3 + $0x4] sm:$0xf]
    %v54 = vld [vmem:[#allocation6] sm:$0xf]
    %v55 = vld [vmem:[#allocation6 + $0x4] sm:$0xf]
    %v56 = vld [vmem:[#allocation6 + $0x8] sm:$0xf]
    %v57 = vld [vmem:[#allocation6 + $0xc] sm:$0xf]
    %v58 = vld [vmem:[#allocation6 + $0x10] sm:$0xf]
    %v59 = vld [vmem:[#allocation6 + $0x14] sm:$0xf]
    %v60 = vld [vmem:[#allocation6 + $0x18] sm:$0xf]
    %v61 = vld [vmem:[#allocation6 + $0x1c] sm:$0xf]
    %v62 = vld [vmem:[#allocation6 + $0x20] sm:$0xf]
    %v63 = vld [vmem:[#allocation6 + $0x24] sm:$0xf]
    %v64 = vld [vmem:[#allocation6 + $0x28] sm:$0xf]
    %v65 = vld [vmem:[#allocation6 + $0x2c] sm:$0xf]
    %v66 = vld [vmem:[#allocation6 + $0x30] sm:$0xf]
    %v67 = vld [vmem:[#allocation6 + $0x34] sm:$0xf]
    %v68 = vld [vmem:[#allocation6 + $0x38] sm:$0xf]
    %v69 = vld [vmem:[#allocation6 + $0x3c] sm:$0xf]
    %v72 = vunpack.c.l.b16 %v52
    %v73 = vunpack.c.l.b16 %v53
    %v74 = vpack.c.b16 %v73, %v72
    %v92 = vunpack.c.l.b16 %v54
    %v93 = vunpack.c.l.b16 %v55
    %v94 = vunpack.c.l.b16 %v56
    %v95 = vunpack.c.l.b16 %v57
    %v96 = vunpack.c.l.b16 %v58
    %v97 = vunpack.c.l.b16 %v59
    %v98 = vunpack.c.l.b16 %v60
    %v99 = vunpack.c.l.b16 %v61
    %v100 = vunpack.c.l.b16 %v62
    %v101 = vunpack.c.l.b16 %v63
    %v102 = vunpack.c.l.b16 %v64
    %v103 = vunpack.c.l.b16 %v65
    %v104 = vunpack.c.l.b16 %v66
    %v105 = vunpack.c.l.b16 %v67
    %v106 = vunpack.c.l.b16 %v68
    %v107 = vunpack.c.l.b16 %v69
    %v108 = vpack.c.b16 %v93, %v92
    %v109 = vpack.c.b16 %v95, %v94
    %v110 = vpack.c.b16 %v97, %v96
    %v111 = vpack.c.b16 %v99, %v98
    %v112 = vpack.c.b16 %v101, %v100
    %v113 = vpack.c.b16 %v103, %v102
    %v114 = vpack.c.b16 %v105, %v104
    %v115 = vpack.c.b16 %v107, %v106
    %124 = vmatprep.subr.bf16.mxu0 0
    %125 = vmatpush1.bf16.msra.mxu0 %v108
    %126 = vmatprep.subr.bf16.mxu0 0
    %127 = vmatpush1.bf16.msra.mxu0 %v109
    %128 = vmatprep.subr.bf16.mxu0 0
    %129 = vmatpush1.bf16.msra.mxu0 %v110
    %130 = vmatprep.subr.bf16.mxu0 0
    %131 = vmatpush1.bf16.msra.mxu0 %v111
    %132 = vmatprep.subr.bf16.mxu0 0
    %133 = vmatpush1.bf16.msra.mxu0 %v112
    %134 = vmatprep.subr.bf16.mxu0 0
    %135 = vmatpush1.bf16.msra.mxu0 %v113
    %136 = vmatprep.subr.bf16.mxu0 0
    %137 = vmatpush1.bf16.msra.mxu0 %v114
    %138 = vmatprep.subr.bf16.mxu0 0
    %139 = vmatpush1.bf16.msra.mxu0 %v115
    %140 = vmatprep.subr.bf16.mxu0 0
    %141 = vmatpush1.bf16.msra.mxu0 0
    %142 = vmatprep.subr.bf16.mxu0 0
    %143 = vmatpush1.bf16.msra.mxu0 0
    %144 = vmatprep.subr.bf16.mxu0 0
    %145 = vmatpush1.bf16.msra.mxu0 0
    %146 = vmatprep.subr.bf16.mxu0 0
    %147 = vmatpush1.bf16.msra.mxu0 0
    %148 = vmatprep.subr.bf16.mxu0 0
    %149 = vmatpush1.bf16.msra.mxu0 0
    %150 = vmatprep.subr.bf16.mxu0 0
    %151 = vmatpush1.bf16.msra.mxu0 0
    %152 = vmatprep.subr.bf16.mxu0 0
    %153 = vmatpush1.bf16.msra.mxu0 0
    %154 = vmatprep.subr.bf16.mxu0 0
    %155 = vmatpush1.bf16.msra.mxu0 0
    %156 = vmatprep.mubr.bf16.mxu0 0
    %157 = vmatmul.mubr.bf16.gmra.mrb[0].mxu0 %v74
    %v158 = vpop.f32.mrb[0].mxu0
    %v159 = vadd.f32 0.0, %v158
    %v160 = vpop.f32.mrb[0].mxu0
    %v161 = vpop.f32.mrb[0].mxu0
    %v162 = vadd.f32 0.0, %v161
    %v163 = vpop.f32.mrb[0].mxu0
    %164 = vdwg.mxu0
    %v165 = vadd.f32 %v50, %v159
    %v166 = vadd.f32 %v51, %v162
    %167 = vst [vmem:[#allocation2] sm:$0xff] %v165
    %168 = vst [vmem:[#allocation2 + $0x8] sm:$0xff] %v166
    // Predicated region
    $region26: #{tpu_custom_call.1} parent=1 // pred_check
      %p169 = pneg %p44
    $region27: #{tpu_custom_call.1} parent=1 // pred_check_branch
      %171 = sbr.rel (%p169) target = $region29
    $region28: #{tpu_custom_call.1} parent=1 // pred_region
      %v172 = vld [vmem:[#allocation2] sm:$0xff]
      %v173 = vld [vmem:[#allocation2 + $0x8] sm:$0xff]
      %v174 = vld [vmem:[%s2] sm:$0x1]
      %v176 = vlaneseq
      %v177 = vshrl.u32 %v176, 7
      %v178 = vsub.s32 0, %v177
      %v179 = vrot.slane %v174, %v178
      %v181 = vadd.f32 %v172, %v179
      %v182 = vadd.f32 %v173, %v179
      %183 = vst [vmem:[#allocation8] sm:$0xff] %v181
      %184 = vst [vmem:[#allocation8 + $0x8] sm:$0xff] %v182
    $region29: #{tpu_custom_call.1} parent=1 // pred_fallthru
      _
    // Predicated region
    $region30: #{tpu_custom_call.1} parent=1 // pred_check
      _
    $region31: #{tpu_custom_call.1} parent=1 // pred_check_branch
      %186 = sbr.rel (0) target = $region33
    $region32: #{tpu_custom_call.1} parent=1 // pred_region
      %s188 = ssub.s32 256, 256
      %189 = vsyncadd [#allocation5], %s188
      %s190 = sshll.u32 [#allocation8], 4
      %s191 = int_to_ptr.vmem [resolvable:$true] %s190
      %196 = dma.vmem_to_hbm [thread:$0]  %s191, 256, %s3, [#allocation5], 128, 128, 8
    $region33: #{tpu_custom_call.1} parent=1 // pred_fallthru
      _
    // Predicated region
    $region34: #{tpu_custom_call.1} parent=1 // pred_check
      _
    $region35: #{tpu_custom_call.1} parent=1 // pred_check_branch
      %198 = sbr.rel (0) target = $region37
    $region36: #{tpu_custom_call.1} parent=1 // pred_region
      %199 = dma.done [#allocation5], 256
    $region37: #{tpu_custom_call.1} parent=1 // pred_fallthru
      _
    %200 = vsyncpa [#allocation4], 1
    %201 = vsyncpa [#allocation7], 1
    %202 = vsyncpa [#allocation5], 1

</llo_original>
